<compile_context>
chip_gen: v5e
topology: v5e:2x2
jax: 0.10.0
libtpu: 0.0.40
codegen_flags: <defaults>
</compile_context>

<pallas_src>
import functools
import math

import jax
import jax.numpy as jnp
from jax.experimental import pallas as pl
from jax.experimental.pallas import tpu as pltpu

_BN_EPS = 1e-5


def _make_fused_kernel(K, pad, Cin, Cout, P):
    """Fused 4-stage kernel for static geometry. All activations are (C, P) f32 values."""
    o1 = K * Cin            # end of stage-0 stacked weights
    o2 = o1 + K * Cout      # end of stage-1 stacked weights
    o3 = o2 + K * Cout      # end of stage-2 stacked weights
    o4 = o3 + Cout          # end of mixer weights

    def kernel(x_ref, m_ref, w_ref, bn_ref, out_ref):
        # x_ref : (Cin, P) f32   input, channel-major / spatial-flat (lane dense)
        # m_ref : (K, P)  f32    per-tap row-boundary validity masks
        # w_ref : (Cout, o4) f32 all conv weights, taps pre-stacked per stage
        # bn_ref: (Cout, 8) f32  packed BN params [g0,b0,g1,b1,g2,b2,gm,bm]
        # out_ref: (Cout, P) f32 lane-dense output

        def im2col(h):
            # h: (c, P) -> (K*c, P) stacked shifted copies (zero outside each row's width).
            c = h.shape[0]
            if pad > 0:
                z = jnp.zeros((c, pad), h.dtype)
                hp = jnp.concatenate([z, h, z], axis=1)      # (c, P + 2*pad), global ends zeroed
            else:
                hp = h
            parts = []
            for k in range(K):                               # K is small & static -> unrolled
                if k == pad:
                    parts.append(h)                          # center tap: no shift, no mask
                else:
                    # lane slice = tap shift; mask zeroes reads that cross a row boundary
                    parts.append(hp[:, k:k + P] * m_ref[k:k + 1, :])
            return jnp.concatenate(parts, axis=0)            # (K*c, P)

        def bn_relu(acc, col):
            # Training-mode BatchNorm (batch stats), centered two-pass variance, + ReLU.
            gamma = bn_ref[:, col:col + 1]                   # (Cout, 1) lane slice
            beta = bn_ref[:, col + 1:col + 2]
            inv_n = 1.0 / P
            mean = jnp.sum(acc, axis=1, keepdims=True) * inv_n      # lane reduce (XLU)
            cen = acc - mean
            var = jnp.sum(cen * cen, axis=1, keepdims=True) * inv_n  # centered (no cancellation)
            scale = gamma * jax.lax.rsqrt(var + _BN_EPS)             # rsqrt -> EUP (free slot)
            return jnp.maximum(cen * scale + beta, 0.0)

        x = x_ref[...]
        # Stage 0: Conv(1,K) -> BN -> ReLU    (one matmul, contraction depth K*Cin)
        h = bn_relu(jnp.dot(w_ref[:, :o1], im2col(x),
                            preferred_element_type=jnp.float32), 0)
        # Stage 1: Conv(1,K) -> BN -> ReLU    (depth K*Cout)
        h = bn_relu(jnp.dot(w_ref[:, o1:o2], im2col(h),
                            preferred_element_type=jnp.float32), 2)
        # Stage 2: Conv(1,K) -> BN -> ReLU
        h = bn_relu(jnp.dot(w_ref[:, o2:o3], im2col(h),
                            preferred_element_type=jnp.float32), 4)
        # 1x1 channel mixer -> BN -> ReLU, stored lane-dense (Cout, P)
        out_ref[...] = bn_relu(jnp.dot(w_ref[:, o3:o4], h,
                                       preferred_element_type=jnp.float32), 6)

    return kernel


def _stacked_taps(w, cin_total, groups):
    """(Cout, Cin_g, 1, K) grouped conv weight -> (Cout, K*cin_total) f32, tap-major
    (column index = k*cin_total + ci), matching the in-kernel im2col row order."""
    cout, cin_g, _, K = w.shape
    out_per_g = cout // groups
    co = jnp.arange(cout)
    ci_global = (co // out_per_g)[:, None] * cin_g + jnp.arange(cin_g)[None, :]   # (Cout, Cin_g)
    dense = jnp.zeros((cout, cin_total, K), jnp.float32)
    dense = dense.at[co[:, None], ci_global, :].set(w[:, :, 0, :].astype(jnp.float32))
    # TODO(synk): for groups>1 this still spends matmul work on structural zeros; switch to
    #             per-group contractions if wide grouped configs ever matter.
    return jnp.transpose(dense, (0, 2, 1)).reshape(cout, K * cin_total)


@functools.partial(jax.jit, static_argnames=("kernel_size", "stride", "groups"))
def basic_frame_block_forward(x, params, *, kernel_size, stride=1, groups=1):
    N, Cin, H, W = x.shape
    K = kernel_size
    pad = int(kernel_size / 2)          # matches the PyTorch module's padding_base
    Cout = params["w0"].shape[0]

    if stride != 1 or K % 2 == 0:
        # TODO(synk): stride>1 / even-K change per-stage widths; add a contiguous-read +
        #             reshape-subsample path for those configs instead of faking it here.
        raise NotImplementedError("fused kernel currently supports stride=1 and odd kernel_size")

    R = N * H
    P = R * W                           # flattened spatial extent = lane dim everywhere

    # NCHW -> channel-major, spatial-flat (Cin, P) f32.  One small relayout pass.
    # TODO(synk): adopt this layout in the surrounding model so neither this nor the
    #             output transpose below is needed (they double HBM traffic at scale).
    x_flat = jnp.transpose(x, (1, 0, 2, 3)).reshape(Cin, P).astype(jnp.float32)

    # Per-tap row-boundary validity masks: tap k reads column w + (k - pad) of each row.
    w_idx = jnp.arange(P, dtype=jnp.int32) % W
    d = jnp.arange(K, dtype=jnp.int32)[:, None] - pad
    masks = ((w_idx[None, :] + d >= 0) & (w_idx[None, :] + d < W)).astype(jnp.float32)   # (K, P)

    # Pack ALL conv weights into one (Cout, K*Cin + 2*K*Cout + Cout) f32 operand (1 DMA),
    # taps pre-stacked so every conv stage is ONE matmul of depth K*C.
    w0 = _stacked_taps(params["w0"], Cin, groups)
    w1 = _stacked_taps(params["w1"], Cout, groups)
    w2 = _stacked_taps(params["w2"], Cout, groups)
    wm = params["wm"][:, :, 0, 0].astype(jnp.float32)
    w_packed = jnp.concatenate([w0, w1, w2, wm], axis=1)

    # Pack the 8 BN gamma/beta vectors into one (Cout, 8) block (1 DMA), lane-sliced in-kernel.
    bn_packed = jnp.stack(
        [params[k] for k in ("g0", "b0", "g1", "b1", "g2", "b2", "gm", "bm")],
        axis=1).astype(jnp.float32)

    kernel = _make_fused_kernel(K, pad, Cin, Cout, P)

    flops = 2 * P * (K * Cin * Cout + 2 * K * Cout * Cout + Cout * Cout)
    bytes_accessed = 4 * (x_flat.size + masks.size + w_packed.size + bn_packed.size + Cout * P)

    out = pl.pallas_call(
        kernel,
        out_shape=jax.ShapeDtypeStruct((Cout, P), jnp.float32),   # lane-dense (last dim = N*H*W)
        grid=(1,),
        in_specs=[
            pl.BlockSpec((Cin, P), lambda i: (0, 0)),
            pl.BlockSpec((K, P), lambda i: (0, 0)),
            pl.BlockSpec(w_packed.shape, lambda i: (0, 0)),
            pl.BlockSpec((Cout, 8), lambda i: (0, 0)),
        ],
        out_specs=pl.BlockSpec((Cout, P), lambda i: (0, 0)),
        compiler_params=pltpu.CompilerParams(
            dimension_semantics=("arbitrary",),
            vmem_limit_bytes=32 * 1024 * 1024,                    # fits v5e/v6e/v7x budgets
        ),
        cost_estimate=pl.CostEstimate(
            flops=flops, transcendentals=4 * Cout, bytes_accessed=bytes_accessed),
    )(x_flat, masks, w_packed, bn_packed)

    # (Cout, N*H*W) -> NCHW.  TODO(synk): fold into the consumer in a real model.
    return out.reshape(Cout, N, H, W).transpose(1, 0, 2, 3)


if __name__ == "__main__":
    kernel_size, ch_in, ch_out, stride, groups = 3, 4, 8, 1, 1
    N, H, W = 2, 16, 16

    key = jax.random.PRNGKey(0)
    k1, k2, k3, k4, kx = jax.random.split(key, 5)

    def conv_w(k, co, ci_g, K):
        # matches PyTorch Conv2d default init scale
        bound = 1.0 / math.sqrt(ci_g * 1 * K)
        return jax.random.uniform(k, (co, ci_g, 1, K), jnp.float32, -bound, bound)

    params = {
        "w0": conv_w(k1, ch_out, ch_in // groups, kernel_size),
        "w1": conv_w(k2, ch_out, ch_out // groups, kernel_size),
        "w2": conv_w(k3, ch_out, ch_out // groups, kernel_size),
        "wm": conv_w(k4, ch_out, ch_out, 1),
        # BatchNorm2d default init; batch statistics (training semantics) computed in-kernel.
        "g0": jnp.ones((ch_out,), jnp.float32), "b0": jnp.zeros((ch_out,), jnp.float32),
        "g1": jnp.ones((ch_out,), jnp.float32), "b1": jnp.zeros((ch_out,), jnp.float32),
        "g2": jnp.ones((ch_out,), jnp.float32), "b2": jnp.zeros((ch_out,), jnp.float32),
        "gm": jnp.ones((ch_out,), jnp.float32), "bm": jnp.zeros((ch_out,), jnp.float32),
    }

    x = jax.random.normal(kx, (N, ch_in, H, W), jnp.float32)  # NCHW, like the PyTorch module

    out = basic_frame_block_forward(
        x, params, kernel_size=kernel_size, stride=stride, groups=groups)
    out = jax.block_until_ready(out)

    # Plain-XLA f32 reference (training-mode BN) for the numerical check.
    pad = int(kernel_size / 2)

    def ref_conv(h, w, strd, p, grps):
        return jax.lax.conv_general_dilated(
            h, w, window_strides=(1, strd), padding=((0, 0), (p, p)),
            dimension_numbers=("NCHW", "OIHW", "NCHW"), feature_group_count=grps)

    def ref_bn_relu(h, g, b):
        m = jnp.mean(h, axis=(0, 2, 3), keepdims=True)
        v = jnp.var(h, axis=(0, 2, 3), keepdims=True)
        return jnp.maximum((h - m) * jax.lax.rsqrt(v + _BN_EPS) * g.reshape(1, -1, 1, 1)
                           + b.reshape(1, -1, 1, 1), 0.0)

    r = ref_bn_relu(ref_conv(x, params["w0"], stride, pad, groups), params["g0"], params["b0"])
    r = ref_bn_relu(ref_conv(r, params["w1"], 1, pad, groups), params["g1"], params["b1"])
    r = ref_bn_relu(ref_conv(r, params["w2"], 1, pad, groups), params["g2"], params["b2"])
    r = ref_bn_relu(ref_conv(r, params["wm"], 1, 0, 1), params["gm"], params["bm"])
    r = jax.block_until_ready(r)

    assert out.shape == r.shape == (N, ch_out, H, W), out.shape
    assert bool(jnp.all(out >= 0.0))  # ReLU output
    # f32 kernel vs f32 XLA reference; tolerance allows MXU f32 multi-pass rounding
    # compounded across four cascaded BN-normalized stages.
    assert bool(jnp.allclose(out, r, rtol=5e-2, atol=5e-2)), float(jnp.max(jnp.abs(out - r)))
    print("KERNEL_OK")
</pallas_src>

<mosaic_0001>
module attributes {stable_mosaic.version = 11 : i64} {
  func.func @kernel(%arg0: i32, %arg1: memref<4x512xf32, #tpu.memory_space<vmem>>, %arg2: memref<3x512xf32, #tpu.memory_space<vmem>>, %arg3: memref<8x68xf32, #tpu.memory_space<vmem>>, %arg4: memref<8x8xf32, #tpu.memory_space<vmem>>, %arg5: memref<8x512xf32, #tpu.memory_space<vmem>>) attributes {dimension_semantics = [#tpu.dimension_semantics<arbitrary>], iteration_bounds = array<i64: 1>, scalar_prefetch = 0 : i64, scratch_operands = 0 : i64, tpu.core_type = #tpu.core_type<tc>, window_params = [{pipeline_mode = #tpu.pipeline_mode<synchronous>, transform_indices = @transform_0, window_bounds = array<i64: 4, 512>}, {pipeline_mode = #tpu.pipeline_mode<synchronous>, transform_indices = @transform_1, window_bounds = array<i64: 3, 512>}, {pipeline_mode = #tpu.pipeline_mode<synchronous>, transform_indices = @transform_2, window_bounds = array<i64: 8, 68>}, {pipeline_mode = #tpu.pipeline_mode<synchronous>, transform_indices = @transform_3, window_bounds = array<i64: 8, 8>}, {pipeline_mode = #tpu.pipeline_mode<synchronous>, transform_indices = @transform_4, window_bounds = array<i64: 8, 512>}]} {
    %c0 = arith.constant 0 : index
    %c0_0 = arith.constant 0 : index
    %0 = vector.load %arg1[%c0, %c0_0] : memref<4x512xf32, #tpu.memory_space<vmem>>, vector<4x512xf32>
    %c0_1 = arith.constant 0 : index
    %c0_2 = arith.constant 0 : index
    %1 = vector.load %arg3[%c0_1, %c0_2] : memref<8x68xf32, #tpu.memory_space<vmem>>, vector<8x12xf32>
    %cst = arith.constant 0.000000e+00 : f32
    %2 = vector.broadcast %cst : f32 to vector<4x1xf32>
    %3 = tpu.concatenate %2, %0, %2 in 1 : vector<4x1xf32>, vector<4x512xf32>, vector<4x1xf32> -> vector<4x514xf32>
    %4 = vector.extract_strided_slice %3 {offsets = [0, 0], sizes = [4, 512], strides = [1, 1]} : vector<4x514xf32> to vector<4x512xf32>
    %c0_3 = arith.constant 0 : index
    %c0_4 = arith.constant 0 : index
    %5 = vector.load %arg2[%c0_3, %c0_4] : memref<3x512xf32, #tpu.memory_space<vmem>>, vector<1x512xf32>
    %6 = vector.broadcast %5 : vector<1x512xf32> to vector<4x512xf32>
    %7 = arith.mulf %4, %6 : vector<4x512xf32>
    %8 = vector.extract_strided_slice %3 {offsets = [0, 2], sizes = [4, 512], strides = [1, 1]} : vector<4x514xf32> to vector<4x512xf32>
    %c2 = arith.constant 2 : index
    %c0_5 = arith.constant 0 : index
    %9 = vector.load %arg2[%c2, %c0_5] : memref<3x512xf32, #tpu.memory_space<vmem>>, vector<1x512xf32>
    %10 = vector.broadcast %9 : vector<1x512xf32> to vector<4x512xf32>
    %11 = arith.mulf %8, %10 : vector<4x512xf32>
    %12 = tpu.concatenate %7, %0, %11 in 0 : vector<4x512xf32>, vector<4x512xf32>, vector<4x512xf32> -> vector<12x512xf32>
    %cst_6 = arith.constant dense<0.000000e+00> : vector<8x512xf32>
    %13 = tpu.matmul %1, %12, %cst_6 {dimension_numbers = #tpu.dot_dimension_numbers<[1], [0], [0], [1], [0, 0, 1, 1], [], []>} : vector<8x12xf32>, vector<12x512xf32>, vector<8x512xf32> -> vector<8x512xf32>
    %c0_7 = arith.constant 0 : index
    %c0_8 = arith.constant 0 : index
    %14 = vector.load %arg4[%c0_7, %c0_8] : memref<8x8xf32, #tpu.memory_space<vmem>>, vector<8x1xf32>
    %c0_9 = arith.constant 0 : index
    %c1 = arith.constant 1 : index
    %15 = vector.load %arg4[%c0_9, %c1] : memref<8x8xf32, #tpu.memory_space<vmem>>, vector<8x1xf32>
    %cst_10 = arith.constant dense<0.000000e+00> : vector<8xf32>
    %16 = vector.multi_reduction <add>, %13, %cst_10 [1] : vector<8x512xf32> to vector<8xf32>
    %17 = vector.shape_cast %16 : vector<8xf32> to vector<8x1xf32>
    %cst_11 = arith.constant 0.001953125 : f32
    %18 = vector.broadcast %cst_11 : f32 to vector<8x1xf32>
    %19 = arith.mulf %17, %18 : vector<8x1xf32>
    %20 = vector.broadcast %19 : vector<8x1xf32> to vector<8x512xf32>
    %21 = arith.subf %13, %20 : vector<8x512xf32>
    %22 = arith.mulf %21, %21 : vector<8x512xf32>
    %cst_12 = arith.constant dense<0.000000e+00> : vector<8xf32>
    %23 = vector.multi_reduction <add>, %22, %cst_12 [1] : vector<8x512xf32> to vector<8xf32>
    %24 = vector.shape_cast %23 : vector<8xf32> to vector<8x1xf32>
    %cst_13 = arith.constant 0.001953125 : f32
    %25 = vector.broadcast %cst_13 : f32 to vector<8x1xf32>
    %26 = arith.mulf %24, %25 : vector<8x1xf32>
    %cst_14 = arith.constant 9.99999974E-6 : f32
    %27 = vector.broadcast %cst_14 : f32 to vector<8x1xf32>
    %28 = arith.addf %26, %27 : vector<8x1xf32>
    %29 = math.rsqrt %28 : vector<8x1xf32>
    %30 = arith.mulf %14, %29 : vector<8x1xf32>
    %31 = vector.broadcast %30 : vector<8x1xf32> to vector<8x512xf32>
    %32 = arith.mulf %21, %31 : vector<8x512xf32>
    %33 = vector.broadcast %15 : vector<8x1xf32> to vector<8x512xf32>
    %34 = arith.addf %32, %33 : vector<8x512xf32>
    %cst_15 = arith.constant 0.000000e+00 : f32
    %35 = vector.broadcast %cst_15 : f32 to vector<8x512xf32>
    %36 = arith.maximumf %34, %35 : vector<8x512xf32>
    %c0_16 = arith.constant 0 : index
    %c12 = arith.constant 12 : index
    %37 = vector.load %arg3[%c0_16, %c12] : memref<8x68xf32, #tpu.memory_space<vmem>>, vector<8x24xf32>
    %cst_17 = arith.constant 0.000000e+00 : f32
    %38 = vector.broadcast %cst_17 : f32 to vector<8x1xf32>
    %39 = tpu.concatenate %38, %36, %38 in 1 : vector<8x1xf32>, vector<8x512xf32>, vector<8x1xf32> -> vector<8x514xf32>
    %40 = vector.extract_strided_slice %39 {offsets = [0, 0], sizes = [8, 512], strides = [1, 1]} : vector<8x514xf32> to vector<8x512xf32>
    %c0_18 = arith.constant 0 : index
    %c0_19 = arith.constant 0 : index
    %41 = vector.load %arg2[%c0_18, %c0_19] : memref<3x512xf32, #tpu.memory_space<vmem>>, vector<1x512xf32>
    %42 = vector.broadcast %41 : vector<1x512xf32> to vector<8x512xf32>
    %43 = arith.mulf %40, %42 : vector<8x512xf32>
    %44 = vector.extract_strided_slice %39 {offsets = [0, 2], sizes = [8, 512], strides = [1, 1]} : vector<8x514xf32> to vector<8x512xf32>
    %c2_20 = arith.constant 2 : index
    %c0_21 = arith.constant 0 : index
    %45 = vector.load %arg2[%c2_20, %c0_21] : memref<3x512xf32, #tpu.memory_space<vmem>>, vector<1x512xf32>
    %46 = vector.broadcast %45 : vector<1x512xf32> to vector<8x512xf32>
    %47 = arith.mulf %44, %46 : vector<8x512xf32>
    %48 = tpu.concatenate %43, %36, %47 in 0 : vector<8x512xf32>, vector<8x512xf32>, vector<8x512xf32> -> vector<24x512xf32>
    %cst_22 = arith.constant dense<0.000000e+00> : vector<8x512xf32>
    %49 = tpu.matmul %37, %48, %cst_22 {dimension_numbers = #tpu.dot_dimension_numbers<[1], [0], [0], [1], [0, 0, 1, 1], [], []>} : vector<8x24xf32>, vector<24x512xf32>, vector<8x512xf32> -> vector<8x512xf32>
    %c0_23 = arith.constant 0 : index
    %c2_24 = arith.constant 2 : index
    %50 = vector.load %arg4[%c0_23, %c2_24] : memref<8x8xf32, #tpu.memory_space<vmem>>, vector<8x1xf32>
    %c0_25 = arith.constant 0 : index
    %c3 = arith.constant 3 : index
    %51 = vector.load %arg4[%c0_25, %c3] : memref<8x8xf32, #tpu.memory_space<vmem>>, vector<8x1xf32>
    %cst_26 = arith.constant dense<0.000000e+00> : vector<8xf32>
    %52 = vector.multi_reduction <add>, %49, %cst_26 [1] : vector<8x512xf32> to vector<8xf32>
    %53 = vector.shape_cast %52 : vector<8xf32> to vector<8x1xf32>
    %cst_27 = arith.constant 0.001953125 : f32
    %54 = vector.broadcast %cst_27 : f32 to vector<8x1xf32>
    %55 = arith.mulf %53, %54 : vector<8x1xf32>
    %56 = vector.broadcast %55 : vector<8x1xf32> to vector<8x512xf32>
    %57 = arith.subf %49, %56 : vector<8x512xf32>
    %58 = arith.mulf %57, %57 : vector<8x512xf32>
    %cst_28 = arith.constant dense<0.000000e+00> : vector<8xf32>
    %59 = vector.multi_reduction <add>, %58, %cst_28 [1] : vector<8x512xf32> to vector<8xf32>
    %60 = vector.shape_cast %59 : vector<8xf32> to vector<8x1xf32>
    %cst_29 = arith.constant 0.001953125 : f32
    %61 = vector.broadcast %cst_29 : f32 to vector<8x1xf32>
    %62 = arith.mulf %60, %61 : vector<8x1xf32>
    %cst_30 = arith.constant 9.99999974E-6 : f32
    %63 = vector.broadcast %cst_30 : f32 to vector<8x1xf32>
    %64 = arith.addf %62, %63 : vector<8x1xf32>
    %65 = math.rsqrt %64 : vector<8x1xf32>
    %66 = arith.mulf %50, %65 : vector<8x1xf32>
    %67 = vector.broadcast %66 : vector<8x1xf32> to vector<8x512xf32>
    %68 = arith.mulf %57, %67 : vector<8x512xf32>
    %69 = vector.broadcast %51 : vector<8x1xf32> to vector<8x512xf32>
    %70 = arith.addf %68, %69 : vector<8x512xf32>
    %cst_31 = arith.constant 0.000000e+00 : f32
    %71 = vector.broadcast %cst_31 : f32 to vector<8x512xf32>
    %72 = arith.maximumf %70, %71 : vector<8x512xf32>
    %c0_32 = arith.constant 0 : index
    %c36 = arith.constant 36 : index
    %73 = vector.load %arg3[%c0_32, %c36] : memref<8x68xf32, #tpu.memory_space<vmem>>, vector<8x24xf32>
    %cst_33 = arith.constant 0.000000e+00 : f32
    %74 = vector.broadcast %cst_33 : f32 to vector<8x1xf32>
    %75 = tpu.concatenate %74, %72, %74 in 1 : vector<8x1xf32>, vector<8x512xf32>, vector<8x1xf32> -> vector<8x514xf32>
    %76 = vector.extract_strided_slice %75 {offsets = [0, 0], sizes = [8, 512], strides = [1, 1]} : vector<8x514xf32> to vector<8x512xf32>
    %c0_34 = arith.constant 0 : index
    %c0_35 = arith.constant 0 : index
    %77 = vector.load %arg2[%c0_34, %c0_35] : memref<3x512xf32, #tpu.memory_space<vmem>>, vector<1x512xf32>
    %78 = vector.broadcast %77 : vector<1x512xf32> to vector<8x512xf32>
    %79 = arith.mulf %76, %78 : vector<8x512xf32>
    %80 = vector.extract_strided_slice %75 {offsets = [0, 2], sizes = [8, 512], strides = [1, 1]} : vector<8x514xf32> to vector<8x512xf32>
    %c2_36 = arith.constant 2 : index
    %c0_37 = arith.constant 0 : index
    %81 = vector.load %arg2[%c2_36, %c0_37] : memref<3x512xf32, #tpu.memory_space<vmem>>, vector<1x512xf32>
    %82 = vector.broadcast %81 : vector<1x512xf32> to vector<8x512xf32>
    %83 = arith.mulf %80, %82 : vector<8x512xf32>
    %84 = tpu.concatenate %79, %72, %83 in 0 : vector<8x512xf32>, vector<8x512xf32>, vector<8x512xf32> -> vector<24x512xf32>
    %cst_38 = arith.constant dense<0.000000e+00> : vector<8x512xf32>
    %85 = tpu.matmul %73, %84, %cst_38 {dimension_numbers = #tpu.dot_dimension_numbers<[1], [0], [0], [1], [0, 0, 1, 1], [], []>} : vector<8x24xf32>, vector<24x512xf32>, vector<8x512xf32> -> vector<8x512xf32>
    %c0_39 = arith.constant 0 : index
    %c4 = arith.constant 4 : index
    %86 = vector.load %arg4[%c0_39, %c4] : memref<8x8xf32, #tpu.memory_space<vmem>>, vector<8x1xf32>
    %c0_40 = arith.constant 0 : index
    %c5 = arith.constant 5 : index
    %87 = vector.load %arg4[%c0_40, %c5] : memref<8x8xf32, #tpu.memory_space<vmem>>, vector<8x1xf32>
    %cst_41 = arith.constant dense<0.000000e+00> : vector<8xf32>
    %88 = vector.multi_reduction <add>, %85, %cst_41 [1] : vector<8x512xf32> to vector<8xf32>
    %89 = vector.shape_cast %88 : vector<8xf32> to vector<8x1xf32>
    %cst_42 = arith.constant 0.001953125 : f32
    %90 = vector.broadcast %cst_42 : f32 to vector<8x1xf32>
    %91 = arith.mulf %89, %90 : vector<8x1xf32>
    %92 = vector.broadcast %91 : vector<8x1xf32> to vector<8x512xf32>
    %93 = arith.subf %85, %92 : vector<8x512xf32>
    %94 = arith.mulf %93, %93 : vector<8x512xf32>
    %cst_43 = arith.constant dense<0.000000e+00> : vector<8xf32>
    %95 = vector.multi_reduction <add>, %94, %cst_43 [1] : vector<8x512xf32> to vector<8xf32>
    %96 = vector.shape_cast %95 : vector<8xf32> to vector<8x1xf32>
    %cst_44 = arith.constant 0.001953125 : f32
    %97 = vector.broadcast %cst_44 : f32 to vector<8x1xf32>
    %98 = arith.mulf %96, %97 : vector<8x1xf32>
    %cst_45 = arith.constant 9.99999974E-6 : f32
    %99 = vector.broadcast %cst_45 : f32 to vector<8x1xf32>
    %100 = arith.addf %98, %99 : vector<8x1xf32>
    %101 = math.rsqrt %100 : vector<8x1xf32>
    %102 = arith.mulf %86, %101 : vector<8x1xf32>
    %103 = vector.broadcast %102 : vector<8x1xf32> to vector<8x512xf32>
    %104 = arith.mulf %93, %103 : vector<8x512xf32>
    %105 = vector.broadcast %87 : vector<8x1xf32> to vector<8x512xf32>
    %106 = arith.addf %104, %105 : vector<8x512xf32>
    %cst_46 = arith.constant 0.000000e+00 : f32
    %107 = vector.broadcast %cst_46 : f32 to vector<8x512xf32>
    %108 = arith.maximumf %106, %107 : vector<8x512xf32>
    %c0_47 = arith.constant 0 : index
    %c60 = arith.constant 60 : index
    %109 = vector.load %arg3[%c0_47, %c60] : memref<8x68xf32, #tpu.memory_space<vmem>>, vector<8x8xf32>
    %cst_48 = arith.constant dense<0.000000e+00> : vector<8x512xf32>
    %110 = tpu.matmul %109, %108, %cst_48 {dimension_numbers = #tpu.dot_dimension_numbers<[1], [0], [0], [1], [0, 0, 1, 1], [], []>} : vector<8x8xf32>, vector<8x512xf32>, vector<8x512xf32> -> vector<8x512xf32>
    %c0_49 = arith.constant 0 : index
    %c6 = arith.constant 6 : index
    %111 = vector.load %arg4[%c0_49, %c6] : memref<8x8xf32, #tpu.memory_space<vmem>>, vector<8x1xf32>
    %c0_50 = arith.constant 0 : index
    %c7 = arith.constant 7 : index
    %112 = vector.load %arg4[%c0_50, %c7] : memref<8x8xf32, #tpu.memory_space<vmem>>, vector<8x1xf32>
    %cst_51 = arith.constant dense<0.000000e+00> : vector<8xf32>
    %113 = vector.multi_reduction <add>, %110, %cst_51 [1] : vector<8x512xf32> to vector<8xf32>
    %114 = vector.shape_cast %113 : vector<8xf32> to vector<8x1xf32>
    %cst_52 = arith.constant 0.001953125 : f32
    %115 = vector.broadcast %cst_52 : f32 to vector<8x1xf32>
    %116 = arith.mulf %114, %115 : vector<8x1xf32>
    %117 = vector.broadcast %116 : vector<8x1xf32> to vector<8x512xf32>
    %118 = arith.subf %110, %117 : vector<8x512xf32>
    %119 = arith.mulf %118, %118 : vector<8x512xf32>
    %cst_53 = arith.constant dense<0.000000e+00> : vector<8xf32>
    %120 = vector.multi_reduction <add>, %119, %cst_53 [1] : vector<8x512xf32> to vector<8xf32>
    %121 = vector.shape_cast %120 : vector<8xf32> to vector<8x1xf32>
    %cst_54 = arith.constant 0.001953125 : f32
    %122 = vector.broadcast %cst_54 : f32 to vector<8x1xf32>
    %123 = arith.mulf %121, %122 : vector<8x1xf32>
    %cst_55 = arith.constant 9.99999974E-6 : f32
    %124 = vector.broadcast %cst_55 : f32 to vector<8x1xf32>
    %125 = arith.addf %123, %124 : vector<8x1xf32>
    %126 = math.rsqrt %125 : vector<8x1xf32>
    %127 = arith.mulf %111, %126 : vector<8x1xf32>
    %128 = vector.broadcast %127 : vector<8x1xf32> to vector<8x512xf32>
    %129 = arith.mulf %118, %128 : vector<8x512xf32>
    %130 = vector.broadcast %112 : vector<8x1xf32> to vector<8x512xf32>
    %131 = arith.addf %129, %130 : vector<8x512xf32>
    %cst_56 = arith.constant 0.000000e+00 : f32
    %132 = vector.broadcast %cst_56 : f32 to vector<8x512xf32>
    %133 = arith.maximumf %131, %132 : vector<8x512xf32>
    %c0_57 = arith.constant 0 : index
    %c0_58 = arith.constant 0 : index
    %134 = vector.load %arg5[%c0_57, %c0_58] : memref<8x512xf32, #tpu.memory_space<vmem>>, vector<8x512xf32>
    tpu.vector_store %arg5[%c0_57, %c0_58], %133 {strides = array<i32>} : memref<8x512xf32, #tpu.memory_space<vmem>>, vector<8x512xf32>,
    return
  }
  func.func @transform_0(%arg0: i32) -> (i32, i32) {
    %c0_i32 = arith.constant 0 : i32
    %c0_i32_0 = arith.constant 0 : i32
    %c0_i32_1 = arith.constant 0 : i32
    return %c0_i32, %c0_i32_0 : i32, i32
  }
  func.func @transform_1(%arg0: i32) -> (i32, i32) {
    %c0_i32 = arith.constant 0 : i32
    %c0_i32_0 = arith.constant 0 : i32
    %c0_i32_1 = arith.constant 0 : i32
    return %c0_i32, %c0_i32_0 : i32, i32
  }
  func.func @transform_2(%arg0: i32) -> (i32, i32) {
    %c0_i32 = arith.constant 0 : i32
    %c0_i32_0 = arith.constant 0 : i32
    %c0_i32_1 = arith.constant 0 : i32
    return %c0_i32, %c0_i32_0 : i32, i32
  }
  func.func @transform_3(%arg0: i32) -> (i32, i32) {
    %c0_i32 = arith.constant 0 : i32
    %c0_i32_0 = arith.constant 0 : i32
    %c0_i32_1 = arith.constant 0 : i32
    return %c0_i32, %c0_i32_0 : i32, i32
  }
  func.func @transform_4(%arg0: i32) -> (i32, i32) {
    %c0_i32 = arith.constant 0 : i32
    %c0_i32_0 = arith.constant 0 : i32
    %c0_i32_1 = arith.constant 0 : i32
    return %c0_i32, %c0_i32_0 : i32, i32
  }
}

</mosaic_0001>

<llo_original>
// kernel: basic_frame_block_forward.1
$region0: #{basic_frame_block_forward.1}
  #allocation0 [shape = 'u32[]', space=smem, size = 0x4, offset = 0x4, fixed_abs, tag = 'smem constant byte address 0x4 - core index']
  #allocation1 [shape = 'u32[72,128]{1,0:T(1,128)}', space=vmem, size = 0x9000, scoped, tag = 'internal scratch']
  %s0 = inlined_call_operand.vmem [shape: f32[4,512], index: 0, kind: input, shape index: {}]
  %s1 = inlined_call_operand.vmem [shape: f32[3,512], index: 1, kind: input, shape index: {}]
  %s2 = inlined_call_operand.vmem [shape: f32[8,68], index: 2, kind: input, shape index: {}]
  %s3 = inlined_call_operand.vmem [shape: f32[8,8], index: 3, kind: input, shape index: {}]
  %s4 = inlined_call_operand.vmem [shape: f32[8,512], index: 4, kind: output, shape index: {}]
  %s5 = sld [smem:[#allocation0]]
  $region26: #{basic_frame_block_forward.1} parent=0
    _
  %s7 = ssub.s32 1, %s5
  %s8 = scalar_select 0, %s7, %s5
  // Predicated region
  $region2: #{basic_frame_block_forward.1} parent=0 // pred_check
    _
  $region3: #{basic_frame_block_forward.1} parent=0 // pred_check_branch
    %10 = sbr.rel (0) target = $region5
  $region4: #{basic_frame_block_forward.1} parent=0 // pred_region
    _
  $region5: #{basic_frame_block_forward.1} parent=0 // pred_fallthru
    _
  // Predicated region
  $region6: #{basic_frame_block_forward.1} parent=0 // pred_check
    _
  $region7: #{basic_frame_block_forward.1} parent=0 // pred_check_branch
    %12 = sbr.rel (0) target = $region9
  $region8: #{basic_frame_block_forward.1} parent=0 // pred_region
    _
  $region9: #{basic_frame_block_forward.1} parent=0 // pred_fallthru
    _
  // Predicated region
  $region10: #{basic_frame_block_forward.1} parent=0 // pred_check
    _
  $region11: #{basic_frame_block_forward.1} parent=0 // pred_check_branch
    %14 = sbr.rel (0) target = $region13
  $region12: #{basic_frame_block_forward.1} parent=0 // pred_region
    _
  $region13: #{basic_frame_block_forward.1} parent=0 // pred_fallthru
    _
  // Predicated region
  $region14: #{basic_frame_block_forward.1} parent=0 // pred_check
    _
  $region15: #{basic_frame_block_forward.1} parent=0 // pred_check_branch
    %16 = sbr.rel (0) target = $region17
  $region16: #{basic_frame_block_forward.1} parent=0 // pred_region
    _
  $region17: #{basic_frame_block_forward.1} parent=0 // pred_fallthru
    _
  %v17 = vld [vmem:[%s0] sm:$0xff]
  %v18 = vld [vmem:[%s0 + $0x8] sm:$0xff]
  %v19 = vld [vmem:[%s2] sm:$0xff]
  %22 = vst [vmem:[#allocation1] ss:$2 sm:$0xff] %v17
  %s23 = scalar_lea.vmem [#allocation1], 16
  %24 = vst [vmem:[%s23] ss:$2 sm:$0xff] %v18
  %v25 = vld.sshfl [vmem:[#allocation1] sm:$0xff pattern:$0x75316420]
  %v26 = vld.sshfl [vmem:[#allocation1 + $0x8] sm:$0xff pattern:$0x75316420]
  %v27 = vld.sshfl [vmem:[#allocation1 + $0x10] sm:$0xff pattern:$0x75316420]
  %v28 = vld.sshfl [vmem:[#allocation1 + $0x18] sm:$0xff pattern:$0x75316420]
  %29 = vrot.lane.b32.xlu0 %v25, 1
  %v30 = vpop.permute.xlu0 %29
  %31 = vrot.lane.b32.xlu0 %v26, 1
  %v32 = vpop.permute.xlu0 %31
  %33 = vrot.lane.b32.xlu0 %v27, 1
  %v34 = vpop.permute.xlu0 %33
  %35 = vrot.lane.b32.xlu0 %v28, 1
  %v36 = vpop.permute.xlu0 %35
  %vm37 = vcmask 7168
  %v38 = vsel %vm37, %v30, %v32
  %v39 = vsel %vm37, %v32, %v34
  %v40 = vsel %vm37, %v34, %v36
  %v46 = vsel %vm37, 0.0, %v30
  %v47 = vsel %vm37, %v36, 0.0
  %v48 = vld [vmem:[%s1] ss:$4 sm:$0xf]
  %v50 = vperm.slane %v48, 0
  %v51 = vperm.slane %v48, 1
  %v52 = vperm.slane %v48, 2
  %v53 = vperm.slane %v48, 3
  %v58 = vmul.f32 %v46, %v50
  %v59 = vmul.f32 %v38, %v51
  %v60 = vmul.f32 %v39, %v52
  %v61 = vmul.f32 %v40, %v53
  %s62 = scalar_lea.vmem %s1, 2
  %v63 = vld [vmem:[%s62] ss:$4 sm:$0xf]
  %v65 = vperm.slane %v63, 0
  %v66 = vperm.slane %v63, 1
  %v67 = vperm.slane %v63, 2
  %v68 = vperm.slane %v63, 3
  %69 = vrot.lane.b32.xlu0 %v65, 2
  %v70 = vpop.permute.xlu0 %69
  %71 = vrot.lane.b32.xlu0 %v66, 2
  %v72 = vpop.permute.xlu0 %71
  %73 = vrot.lane.b32.xlu0 %v67, 2
  %v74 = vpop.permute.xlu0 %73
  %75 = vrot.lane.b32.xlu0 %v68, 2
  %v76 = vpop.permute.xlu0 %75
  %vm77 = vcmask 15360
  %v78 = vsel %vm77, %v70, %v72
  %v79 = vsel %vm77, %v72, %v74
  %v80 = vsel %vm77, %v74, %v76
  %v86 = vmul.f32 %v46, %v70
  %v87 = vmul.f32 %v38, %v78
  %v88 = vmul.f32 %v39, %v79
  %v89 = vmul.f32 %v40, %v80
  %v90 = vmul.f32 %v47, %v76
  %s91 = scalar_lea.vmem [#allocation1], 1
  %92 = vst [vmem:[%s91] ss:$2 sm:$0xff] %v17
  %s93 = scalar_lea.vmem [#allocation1], 17
  %94 = vst [vmem:[%s93] ss:$2 sm:$0xff] %v18
  %v95 = vld.sshfl [vmem:[#allocation1] sm:$0xff pattern:$0x75316420]
  %v96 = vld.sshfl [vmem:[#allocation1 + $0x8] sm:$0xff pattern:$0x75316420]
  %v97 = vld.sshfl [vmem:[#allocation1 + $0x10] sm:$0xff pattern:$0x75316420]
  %v98 = vld.sshfl [vmem:[#allocation1 + $0x18] sm:$0xff pattern:$0x75316420]
  %108 = vrot.lane.b32.xlu0 %v86, 126
  %v109 = vpop.permute.xlu0 %108
  %110 = vrot.lane.b32.xlu0 %v87, 126
  %v111 = vpop.permute.xlu0 %110
  %112 = vrot.lane.b32.xlu0 %v88, 126
  %v113 = vpop.permute.xlu0 %112
  %114 = vrot.lane.b32.xlu0 %v89, 126
  %v115 = vpop.permute.xlu0 %114
  %116 = vrot.lane.b32.xlu0 %v90, 126
  %v117 = vpop.permute.xlu0 %116
  %vm118 = vcmask 1031168
  %v119 = vsel %vm118, %v109, %v111
  %v120 = vsel %vm118, %v111, %v113
  %v121 = vsel %vm118, %v113, %v115
  %v122 = vsel %vm118, %v115, %v117
  %vm123 = vcmask 1043456
  %v124 = vsel %vm123, %v58, %v95
  %v125 = vsel %vm123, %v59, %v96
  %v126 = vsel %vm123, %v60, %v97
  %v127 = vsel %vm123, %v61, %v98
  %vm128 = vcmask 97280
  %v130 = vsel %vm128, %v19, 0
  %v132 = vsel %vm123, %v119, 0
  %v134 = vsel %vm123, %v120, 0
  %v136 = vsel %vm123, %v121, 0
  %v138 = vsel %vm123, %v122, 0
  %140 = vmatpush.msra.mxu0 0.0
  %141 = vmatpush.msra.mxu0 0.0
  %142 = vmatpush.msra.mxu0 0.0
  %143 = vmatpush.msra.mxu0 0.0
  %144 = vmatpush.msra.mxu0 0.0
  %145 = vmatpush.msra.mxu0 0.0
  %146 = vmatpush.msra.mxu0 0.0
  %147 = vmatpush.msra.mxu0 0.0
  %148 = vmatpush.msra.mxu0 0.0
  %149 = vmatpush.msra.mxu0 0.0
  %150 = vmatpush.msra.mxu0 0.0
  %151 = vmatpush.msra.mxu0 0.0
  %152 = vmatpush.msra.mxu0 0.0
  %153 = vmatpush.msra.mxu0 0.0
  %154 = vmatpush.msra.mxu0 %v132
  %155 = vmatpush.msra.mxu0 %v124
  %156 = vmatmul.f32.gmra.mxu0 %v130
  %v157 = vpop.f32.mrf.mxu0
  %v158 = vadd.f32 0.0, %v157
  %159 = vdwg.mxu0
  %160 = vmatpush.msra.mxu0 0.0
  %161 = vmatpush.msra.mxu0 0.0
  %162 = vmatpush.msra.mxu0 0.0
  %163 = vmatpush.msra.mxu0 0.0
  %164 = vmatpush.msra.mxu0 0.0
  %165 = vmatpush.msra.mxu0 0.0
  %166 = vmatpush.msra.mxu0 0.0
  %167 = vmatpush.msra.mxu0 0.0
  %168 = vmatpush.msra.mxu0 0.0
  %169 = vmatpush.msra.mxu0 0.0
  %170 = vmatpush.msra.mxu0 0.0
  %171 = vmatpush.msra.mxu0 0.0
  %172 = vmatpush.msra.mxu0 0.0
  %173 = vmatpush.msra.mxu0 0.0
  %174 = vmatpush.msra.mxu0 %v134
  %175 = vmatpush.msra.mxu0 %v125
  %176 = vmatmul.f32.gmra.mxu0 %v130
  %v177 = vpop.f32.mrf.mxu0
  %v178 = vadd.f32 0.0, %v177
  %179 = vdwg.mxu0
  %180 = vmatpush.msra.mxu0 0.0
  %181 = vmatpush.msra.mxu0 0.0
  %182 = vmatpush.msra.mxu0 0.0
  %183 = vmatpush.msra.mxu0 0.0
  %184 = vmatpush.msra.mxu0 0.0
  %185 = vmatpush.msra.mxu0 0.0
  %186 = vmatpush.msra.mxu0 0.0
  %187 = vmatpush.msra.mxu0 0.0
  %188 = vmatpush.msra.mxu0 0.0
  %189 = vmatpush.msra.mxu0 0.0
  %190 = vmatpush.msra.mxu0 0.0
  %191 = vmatpush.msra.mxu0 0.0
  %192 = vmatpush.msra.mxu0 0.0
  %193 = vmatpush.msra.mxu0 0.0
  %194 = vmatpush.msra.mxu0 %v136
  %195 = vmatpush.msra.mxu0 %v126
  %196 = vmatmul.f32.gmra.mxu0 %v130
  %v197 = vpop.f32.mrf.mxu0
  %v198 = vadd.f32 0.0, %v197
  %199 = vdwg.mxu0
  %200 = vmatpush.msra.mxu0 0.0
  %201 = vmatpush.msra.mxu0 0.0
  %202 = vmatpush.msra.mxu0 0.0
  %203 = vmatpush.msra.mxu0 0.0
  %204 = vmatpush.msra.mxu0 0.0
  %205 = vmatpush.msra.mxu0 0.0
  %206 = vmatpush.msra.mxu0 0.0
  %207 = vmatpush.msra.mxu0 0.0
  %208 = vmatpush.msra.mxu0 0.0
  %209 = vmatpush.msra.mxu0 0.0
  %210 = vmatpush.msra.mxu0 0.0
  %211 = vmatpush.msra.mxu0 0.0
  %212 = vmatpush.msra.mxu0 0.0
  %213 = vmatpush.msra.mxu0 0.0
  %214 = vmatpush.msra.mxu0 %v138
  %215 = vmatpush.msra.mxu0 %v127
  %216 = vmatmul.f32.gmra.mxu0 %v130
  %v217 = vpop.f32.mrf.mxu0
  %v218 = vadd.f32 0.0, %v217
  %219 = vdwg.mxu0
  %v220 = vld [vmem:[%s3] sm:$0xff]
  %v221 = vadd.f32 %v158, %v178
  %v222 = vadd.f32 %v221, %v198
  %v223 = vadd.f32 %v222, %v218
  %224 = vadd.xlane.f32.xlu0 %v223
  %v225 = vpop.xlane.xlu0 %224
  %v226 = vmul.f32 %v225, 0.001953125
  %v227 = vsub.f32 %v158, %v226
  %v228 = vsub.f32 %v178, %v226
  %v229 = vsub.f32 %v198, %v226
  %v230 = vsub.f32 %v218, %v226
  %v231 = vmul.f32 %v227, %v227
  %v232 = vmul.f32 %v228, %v228
  %v233 = vmul.f32 %v229, %v229
  %v234 = vmul.f32 %v230, %v230
  %v235 = vadd.f32 %v231, %v232
  %v236 = vadd.f32 %v235, %v233
  %v237 = vadd.f32 %v236, %v234
  %238 = vadd.xlane.f32.xlu0 %v237
  %v239 = vpop.xlane.xlu0 %238
  %v240 = vmul.f32 %v239, 0.001953125
  %v241 = vadd.f32 %v240, 1e-05
  %v242 = vrsqrt.pop %v241
  %v243 = vmul.f32 %v242, %v241
  %v244 = vmul.f32 %v243, %v242
  %v245 = vmul.f32 0.5, %v244
  %v246 = vsub.f32 1.5, %v245
  %v247 = vmul.f32 %v242, %v246
  %vm248 = vweird.f32 %v241
  %vm249 = vweird.f32 %v242
  %vm250 = vmor %vm248, %vm249
  %v251 = vsel %vm250, %v242, %v247
  %v252 = vmul.f32 %v220, %v251
  %254 = vset.pattern.permute.xlu0 0
  %255 = vperm.xlu0 %254, %v252
  %v256 = vpop.permute.xlu0 %255
  %v258 = vmul.f32 %v227, %v256
  %v259 = vmul.f32 %v228, %v256
  %v260 = vmul.f32 %v229, %v256
  %v261 = vmul.f32 %v230, %v256
  %263 = vset.pattern.permute.xlu0 1
  %264 = vperm.xlu0 %263, %v220
  %v265 = vpop.permute.xlu0 %264
  %v267 = vadd.f32 %v258, %v265
  %v268 = vadd.f32 %v259, %v265
  %v269 = vadd.f32 %v260, %v265
  %v270 = vadd.f32 %v261, %v265
  %v271 = vmax.f32 %v267, 0.0
  %v272 = vmax.f32 %v268, 0.0
  %v273 = vmax.f32 %v269, 0.0
  %v274 = vmax.f32 %v270, 0.0
  %v275 = vld [vmem:[%s2] sm:$0xff]
  %280 = vrot.lane.b32.xlu0 %v271, 1
  %v281 = vpop.permute.xlu0 %280
  %282 = vrot.lane.b32.xlu0 %v272, 1
  %v283 = vpop.permute.xlu0 %282
  %284 = vrot.lane.b32.xlu0 %v273, 1
  %v285 = vpop.permute.xlu0 %284
  %286 = vrot.lane.b32.xlu0 %v274, 1
  %v287 = vpop.permute.xlu0 %286
  %v288 = vsel %vm37, %v281, %v283
  %v289 = vsel %vm37, %v283, %v285
  %v290 = vsel %vm37, %v285, %v287
  %v296 = vsel %vm37, 0.0, %v281
  %v297 = vsel %vm37, %v287, 0.0
  %v298 = vmul.f32 %v296, %v50
  %v299 = vmul.f32 %v288, %v51
  %v300 = vmul.f32 %v289, %v52
  %v301 = vmul.f32 %v290, %v53
  %v302 = vmul.f32 %v296, %v70
  %v303 = vmul.f32 %v288, %v78
  %v304 = vmul.f32 %v289, %v79
  %v305 = vmul.f32 %v290, %v80
  %v306 = vmul.f32 %v297, %v76
  %312 = vrot.lane.b32.xlu0 %v302, 126
  %v313 = vpop.permute.xlu0 %312
  %314 = vrot.lane.b32.xlu0 %v303, 126
  %v315 = vpop.permute.xlu0 %314
  %316 = vrot.lane.b32.xlu0 %v304, 126
  %v317 = vpop.permute.xlu0 %316
  %318 = vrot.lane.b32.xlu0 %v305, 126
  %v319 = vpop.permute.xlu0 %318
  %320 = vrot.lane.b32.xlu0 %v306, 126
  %v321 = vpop.permute.xlu0 %320
  %v322 = vsel %vm118, %v313, %v315
  %v323 = vsel %vm118, %v315, %v317
  %v324 = vsel %vm118, %v317, %v319
  %v325 = vsel %vm118, %v319, %v321
  %331 = vrot.lane.b32.xlu0 %v275, 116
  %v332 = vpop.permute.xlu0 %331
  %vm333 = vcmask 195584
  %v334 = vsel %vm333, %v332, 0
  %336 = vmatpush.msra.mxu0 0.0
  %337 = vmatpush.msra.mxu0 0.0
  %338 = vmatpush.msra.mxu0 0.0
  %339 = vmatpush.msra.mxu0 0.0
  %340 = vmatpush.msra.mxu0 0.0
  %341 = vmatpush.msra.mxu0 0.0
  %342 = vmatpush.msra.mxu0 0.0
  %343 = vmatpush.msra.mxu0 0.0
  %344 = vmatpush.msra.mxu0 0.0
  %345 = vmatpush.msra.mxu0 0.0
  %346 = vmatpush.msra.mxu0 0.0
  %347 = vmatpush.msra.mxu0 0.0
  %348 = vmatpush.msra.mxu0 0.0
  %349 = vmatpush.msra.mxu0 %v322
  %350 = vmatpush.msra.mxu0 %v271
  %351 = vmatpush.msra.mxu0 %v298
  %352 = vmatmul.f32.gmra.mxu0 %v334
  %v353 = vpop.f32.mrf.mxu0
  %v354 = vadd.f32 0.0, %v353
  %355 = vdwg.mxu0
  %356 = vmatpush.msra.mxu0 0.0
  %357 = vmatpush.msra.mxu0 0.0
  %358 = vmatpush.msra.mxu0 0.0
  %359 = vmatpush.msra.mxu0 0.0
  %360 = vmatpush.msra.mxu0 0.0
  %361 = vmatpush.msra.mxu0 0.0
  %362 = vmatpush.msra.mxu0 0.0
  %363 = vmatpush.msra.mxu0 0.0
  %364 = vmatpush.msra.mxu0 0.0
  %365 = vmatpush.msra.mxu0 0.0
  %366 = vmatpush.msra.mxu0 0.0
  %367 = vmatpush.msra.mxu0 0.0
  %368 = vmatpush.msra.mxu0 0.0
  %369 = vmatpush.msra.mxu0 %v323
  %370 = vmatpush.msra.mxu0 %v272
  %371 = vmatpush.msra.mxu0 %v299
  %372 = vmatmul.f32.gmra.mxu0 %v334
  %v373 = vpop.f32.mrf.mxu0
  %v374 = vadd.f32 0.0, %v373
  %375 = vdwg.mxu0
  %376 = vmatpush.msra.mxu0 0.0
  %377 = vmatpush.msra.mxu0 0.0
  %378 = vmatpush.msra.mxu0 0.0
  %379 = vmatpush.msra.mxu0 0.0
  %380 = vmatpush.msra.mxu0 0.0
  %381 = vmatpush.msra.mxu0 0.0
  %382 = vmatpush.msra.mxu0 0.0
  %383 = vmatpush.msra.mxu0 0.0
  %384 = vmatpush.msra.mxu0 0.0
  %385 = vmatpush.msra.mxu0 0.0
  %386 = vmatpush.msra.mxu0 0.0
  %387 = vmatpush.msra.mxu0 0.0
  %388 = vmatpush.msra.mxu0 0.0
  %389 = vmatpush.msra.mxu0 %v324
  %390 = vmatpush.msra.mxu0 %v273
  %391 = vmatpush.msra.mxu0 %v300
  %392 = vmatmul.f32.gmra.mxu0 %v334
  %v393 = vpop.f32.mrf.mxu0
  %v394 = vadd.f32 0.0, %v393
  %395 = vdwg.mxu0
  %396 = vmatpush.msra.mxu0 0.0
  %397 = vmatpush.msra.mxu0 0.0
  %398 = vmatpush.msra.mxu0 0.0
  %399 = vmatpush.msra.mxu0 0.0
  %400 = vmatpush.msra.mxu0 0.0
  %401 = vmatpush.msra.mxu0 0.0
  %402 = vmatpush.msra.mxu0 0.0
  %403 = vmatpush.msra.mxu0 0.0
  %404 = vmatpush.msra.mxu0 0.0
  %405 = vmatpush.msra.mxu0 0.0
  %406 = vmatpush.msra.mxu0 0.0
  %407 = vmatpush.msra.mxu0 0.0
  %408 = vmatpush.msra.mxu0 0.0
  %409 = vmatpush.msra.mxu0 %v325
  %410 = vmatpush.msra.mxu0 %v274
  %411 = vmatpush.msra.mxu0 %v301
  %412 = vmatmul.f32.gmra.mxu0 %v334
  %v413 = vpop.f32.mrf.mxu0
  %v414 = vadd.f32 0.0, %v413
  %415 = vdwg.mxu0
  %v416 = vadd.f32 %v354, %v374
  %v417 = vadd.f32 %v416, %v394
  %v418 = vadd.f32 %v417, %v414
  %419 = vadd.xlane.f32.xlu0 %v418
  %v420 = vpop.xlane.xlu0 %419
  %v421 = vmul.f32 %v420, 0.001953125
  %v422 = vsub.f32 %v354, %v421
  %v423 = vsub.f32 %v374, %v421
  %v424 = vsub.f32 %v394, %v421
  %v425 = vsub.f32 %v414, %v421
  %v426 = vmul.f32 %v422, %v422
  %v427 = vmul.f32 %v423, %v423
  %v428 = vmul.f32 %v424, %v424
  %v429 = vmul.f32 %v425, %v425
  %v430 = vadd.f32 %v426, %v427
  %v431 = vadd.f32 %v430, %v428
  %v432 = vadd.f32 %v431, %v429
  %433 = vadd.xlane.f32.xlu0 %v432
  %v434 = vpop.xlane.xlu0 %433
  %v435 = vmul.f32 %v434, 0.001953125
  %v436 = vadd.f32 %v435, 1e-05
  %v437 = vrsqrt.pop %v436
  %v438 = vmul.f32 %v437, %v436
  %v439 = vmul.f32 %v438, %v437
  %v440 = vmul.f32 0.5, %v439
  %v441 = vsub.f32 1.5, %v440
  %v442 = vmul.f32 %v437, %v441
  %vm443 = vweird.f32 %v436
  %vm444 = vweird.f32 %v437
  %vm445 = vmor %vm443, %vm444
  %v446 = vsel %vm445, %v437, %v442
  %v447 = vmul.f32 %v220, %v446
  %449 = vset.pattern.permute.xlu0 2
  %450 = vperm.xlu0 %449, %v447
  %v451 = vpop.permute.xlu0 %450
  %v453 = vmul.f32 %v422, %v451
  %v454 = vmul.f32 %v423, %v451
  %v455 = vmul.f32 %v424, %v451
  %v456 = vmul.f32 %v425, %v451
  %457 = vset.pattern.permute.xlu0 3
  %458 = vperm.xlu0 %457, %v220
  %v459 = vpop.permute.xlu0 %458
  %v461 = vadd.f32 %v453, %v459
  %v462 = vadd.f32 %v454, %v459
  %v463 = vadd.f32 %v455, %v459
  %v464 = vadd.f32 %v456, %v459
  %v465 = vmax.f32 %v461, 0.0
  %v466 = vmax.f32 %v462, 0.0
  %v467 = vmax.f32 %v463, 0.0
  %v468 = vmax.f32 %v464, 0.0
  %473 = vrot.lane.b32.xlu0 %v465, 1
  %v474 = vpop.permute.xlu0 %473
  %475 = vrot.lane.b32.xlu0 %v466, 1
  %v476 = vpop.permute.xlu0 %475
  %477 = vrot.lane.b32.xlu0 %v467, 1
  %v478 = vpop.permute.xlu0 %477
  %479 = vrot.lane.b32.xlu0 %v468, 1
  %v480 = vpop.permute.xlu0 %479
  %v481 = vsel %vm37, %v474, %v476
  %v482 = vsel %vm37, %v476, %v478
  %v483 = vsel %vm37, %v478, %v480
  %v489 = vsel %vm37, 0.0, %v474
  %v490 = vsel %vm37, %v480, 0.0
  %v491 = vmul.f32 %v489, %v50
  %v492 = vmul.f32 %v481, %v51
  %v493 = vmul.f32 %v482, %v52
  %v494 = vmul.f32 %v483, %v53
  %v495 = vmul.f32 %v489, %v70
  %v496 = vmul.f32 %v481, %v78
  %v497 = vmul.f32 %v482, %v79
  %v498 = vmul.f32 %v483, %v80
  %v499 = vmul.f32 %v490, %v76
  %505 = vrot.lane.b32.xlu0 %v495, 126
  %v506 = vpop.permute.xlu0 %505
  %507 = vrot.lane.b32.xlu0 %v496, 126
  %v508 = vpop.permute.xlu0 %507
  %509 = vrot.lane.b32.xlu0 %v497, 126
  %v510 = vpop.permute.xlu0 %509
  %511 = vrot.lane.b32.xlu0 %v498, 126
  %v512 = vpop.permute.xlu0 %511
  %513 = vrot.lane.b32.xlu0 %v499, 126
  %v514 = vpop.permute.xlu0 %513
  %v515 = vsel %vm118, %v506, %v508
  %v516 = vsel %vm118, %v508, %v510
  %v517 = vsel %vm118, %v510, %v512
  %v518 = vsel %vm118, %v512, %v514
  %523 = vrot.lane.b32.xlu0 %v275, 92
  %v524 = vpop.permute.xlu0 %523
  %v525 = vsel %vm333, %v524, 0
  %527 = vmatpush.msra.mxu0 0.0
  %528 = vmatpush.msra.mxu0 0.0
  %529 = vmatpush.msra.mxu0 0.0
  %530 = vmatpush.msra.mxu0 0.0
  %531 = vmatpush.msra.mxu0 0.0
  %532 = vmatpush.msra.mxu0 0.0
  %533 = vmatpush.msra.mxu0 0.0
  %534 = vmatpush.msra.mxu0 0.0
  %535 = vmatpush.msra.mxu0 0.0
  %536 = vmatpush.msra.mxu0 0.0
  %537 = vmatpush.msra.mxu0 0.0
  %538 = vmatpush.msra.mxu0 0.0
  %539 = vmatpush.msra.mxu0 0.0
  %540 = vmatpush.msra.mxu0 %v515
  %541 = vmatpush.msra.mxu0 %v465
  %542 = vmatpush.msra.mxu0 %v491
  %543 = vmatmul.f32.gmra.mxu0 %v525
  %v544 = vpop.f32.mrf.mxu0
  %v545 = vadd.f32 0.0, %v544
  %546 = vdwg.mxu0
  %547 = vmatpush.msra.mxu0 0.0
  %548 = vmatpush.msra.mxu0 0.0
  %549 = vmatpush.msra.mxu0 0.0
  %550 = vmatpush.msra.mxu0 0.0
  %551 = vmatpush.msra.mxu0 0.0
  %552 = vmatpush.msra.mxu0 0.0
  %553 = vmatpush.msra.mxu0 0.0
  %554 = vmatpush.msra.mxu0 0.0
  %555 = vmatpush.msra.mxu0 0.0
  %556 = vmatpush.msra.mxu0 0.0
  %557 = vmatpush.msra.mxu0 0.0
  %558 = vmatpush.msra.mxu0 0.0
  %559 = vmatpush.msra.mxu0 0.0
  %560 = vmatpush.msra.mxu0 %v516
  %561 = vmatpush.msra.mxu0 %v466
  %562 = vmatpush.msra.mxu0 %v492
  %563 = vmatmul.f32.gmra.mxu0 %v525
  %v564 = vpop.f32.mrf.mxu0
  %v565 = vadd.f32 0.0, %v564
  %566 = vdwg.mxu0
  %567 = vmatpush.msra.mxu0 0.0
  %568 = vmatpush.msra.mxu0 0.0
  %569 = vmatpush.msra.mxu0 0.0
  %570 = vmatpush.msra.mxu0 0.0
  %571 = vmatpush.msra.mxu0 0.0
  %572 = vmatpush.msra.mxu0 0.0
  %573 = vmatpush.msra.mxu0 0.0
  %574 = vmatpush.msra.mxu0 0.0
  %575 = vmatpush.msra.mxu0 0.0
  %576 = vmatpush.msra.mxu0 0.0
  %577 = vmatpush.msra.mxu0 0.0
  %578 = vmatpush.msra.mxu0 0.0
  %579 = vmatpush.msra.mxu0 0.0
  %580 = vmatpush.msra.mxu0 %v517
  %581 = vmatpush.msra.mxu0 %v467
  %582 = vmatpush.msra.mxu0 %v493
  %583 = vmatmul.f32.gmra.mxu0 %v525
  %v584 = vpop.f32.mrf.mxu0
  %v585 = vadd.f32 0.0, %v584
  %586 = vdwg.mxu0
  %587 = vmatpush.msra.mxu0 0.0
  %588 = vmatpush.msra.mxu0 0.0
  %589 = vmatpush.msra.mxu0 0.0
  %590 = vmatpush.msra.mxu0 0.0
  %591 = vmatpush.msra.mxu0 0.0
  %592 = vmatpush.msra.mxu0 0.0
  %593 = vmatpush.msra.mxu0 0.0
  %594 = vmatpush.msra.mxu0 0.0
  %595 = vmatpush.msra.mxu0 0.0
  %596 = vmatpush.msra.mxu0 0.0
  %597 = vmatpush.msra.mxu0 0.0
  %598 = vmatpush.msra.mxu0 0.0
  %599 = vmatpush.msra.mxu0 0.0
  %600 = vmatpush.msra.mxu0 %v518
  %601 = vmatpush.msra.mxu0 %v468
  %602 = vmatpush.msra.mxu0 %v494
  %603 = vmatmul.f32.gmra.mxu0 %v525
  %v604 = vpop.f32.mrf.mxu0
  %v605 = vadd.f32 0.0, %v604
  %606 = vdwg.mxu0
  %v607 = vadd.f32 %v545, %v565
  %v608 = vadd.f32 %v607, %v585
  %v609 = vadd.f32 %v608, %v605
  %610 = vadd.xlane.f32.xlu0 %v609
  %v611 = vpop.xlane.xlu0 %610
  %v612 = vmul.f32 %v611, 0.001953125
  %v613 = vsub.f32 %v545, %v612
  %v614 = vsub.f32 %v565, %v612
  %v615 = vsub.f32 %v585, %v612
  %v616 = vsub.f32 %v605, %v612
  %v617 = vmul.f32 %v613, %v613
  %v618 = vmul.f32 %v614, %v614
  %v619 = vmul.f32 %v615, %v615
  %v620 = vmul.f32 %v616, %v616
  %v621 = vadd.f32 %v617, %v618
  %v622 = vadd.f32 %v621, %v619
  %v623 = vadd.f32 %v622, %v620
  %624 = vadd.xlane.f32.xlu0 %v623
  %v625 = vpop.xlane.xlu0 %624
  %v626 = vmul.f32 %v625, 0.001953125
  %v627 = vadd.f32 %v626, 1e-05
  %v628 = vrsqrt.pop %v627
  %v629 = vmul.f32 %v628, %v627
  %v630 = vmul.f32 %v629, %v628
  %v631 = vmul.f32 0.5, %v630
  %v632 = vsub.f32 1.5, %v631
  %v633 = vmul.f32 %v628, %v632
  %vm634 = vweird.f32 %v627
  %vm635 = vweird.f32 %v628
  %vm636 = vmor %vm634, %vm635
  %v637 = vsel %vm636, %v628, %v633
  %v638 = vmul.f32 %v220, %v637
  %640 = vset.pattern.permute.xlu0 4
  %641 = vperm.xlu0 %640, %v638
  %v642 = vpop.permute.xlu0 %641
  %v644 = vmul.f32 %v613, %v642
  %v645 = vmul.f32 %v614, %v642
  %v646 = vmul.f32 %v615, %v642
  %v647 = vmul.f32 %v616, %v642
  %648 = vset.pattern.permute.xlu0 5
  %649 = vperm.xlu0 %648, %v220
  %v650 = vpop.permute.xlu0 %649
  %v652 = vadd.f32 %v644, %v650
  %v653 = vadd.f32 %v645, %v650
  %v654 = vadd.f32 %v646, %v650
  %v655 = vadd.f32 %v647, %v650
  %v656 = vmax.f32 %v652, 0.0
  %v657 = vmax.f32 %v653, 0.0
  %v658 = vmax.f32 %v654, 0.0
  %v659 = vmax.f32 %v655, 0.0
  %660 = vrot.lane.b32.xlu0 %v275, 68
  %v661 = vpop.permute.xlu0 %660
  %vm662 = vcmask 64512
  %v663 = vsel %vm662, %v661, 0
  %665 = vmatpush.msra.mxu0 0.0
  %666 = vmatpush.msra.mxu0 0.0
  %667 = vmatpush.msra.mxu0 0.0
  %668 = vmatpush.msra.mxu0 0.0
  %669 = vmatpush.msra.mxu0 0.0
  %670 = vmatpush.msra.mxu0 0.0
  %671 = vmatpush.msra.mxu0 0.0
  %672 = vmatpush.msra.mxu0 0.0
  %673 = vmatpush.msra.mxu0 0.0
  %674 = vmatpush.msra.mxu0 0.0
  %675 = vmatpush.msra.mxu0 0.0
  %676 = vmatpush.msra.mxu0 0.0
  %677 = vmatpush.msra.mxu0 0.0
  %678 = vmatpush.msra.mxu0 0.0
  %679 = vmatpush.msra.mxu0 0.0
  %680 = vmatpush.msra.mxu0 %v656
  %681 = vmatmul.f32.gmra.mxu0 %v663
  %v682 = vpop.f32.mrf.mxu0
  %v683 = vadd.f32 0.0, %v682
  %684 = vdwg.mxu0
  %685 = vmatpush.msra.mxu0 0.0
  %686 = vmatpush.msra.mxu0 0.0
  %687 = vmatpush.msra.mxu0 0.0
  %688 = vmatpush.msra.mxu0 0.0
  %689 = vmatpush.msra.mxu0 0.0
  %690 = vmatpush.msra.mxu0 0.0
  %691 = vmatpush.msra.mxu0 0.0
  %692 = vmatpush.msra.mxu0 0.0
  %693 = vmatpush.msra.mxu0 0.0
  %694 = vmatpush.msra.mxu0 0.0
  %695 = vmatpush.msra.mxu0 0.0
  %696 = vmatpush.msra.mxu0 0.0
  %697 = vmatpush.msra.mxu0 0.0
  %698 = vmatpush.msra.mxu0 0.0
  %699 = vmatpush.msra.mxu0 0.0
  %700 = vmatpush.msra.mxu0 %v657
  %701 = vmatmul.f32.gmra.mxu0 %v663
  %v702 = vpop.f32.mrf.mxu0
  %v703 = vadd.f32 0.0, %v702
  %704 = vdwg.mxu0
  %705 = vmatpush.msra.mxu0 0.0
  %706 = vmatpush.msra.mxu0 0.0
  %707 = vmatpush.msra.mxu0 0.0
  %708 = vmatpush.msra.mxu0 0.0
  %709 = vmatpush.msra.mxu0 0.0
  %710 = vmatpush.msra.mxu0 0.0
  %711 = vmatpush.msra.mxu0 0.0
  %712 = vmatpush.msra.mxu0 0.0
  %713 = vmatpush.msra.mxu0 0.0
  %714 = vmatpush.msra.mxu0 0.0
  %715 = vmatpush.msra.mxu0 0.0
  %716 = vmatpush.msra.mxu0 0.0
  %717 = vmatpush.msra.mxu0 0.0
  %718 = vmatpush.msra.mxu0 0.0
  %719 = vmatpush.msra.mxu0 0.0
  %720 = vmatpush.msra.mxu0 %v658
  %721 = vmatmul.f32.gmra.mxu0 %v663
  %v722 = vpop.f32.mrf.mxu0
  %v723 = vadd.f32 0.0, %v722
  %724 = vdwg.mxu0
  %725 = vmatpush.msra.mxu0 0.0
  %726 = vmatpush.msra.mxu0 0.0
  %727 = vmatpush.msra.mxu0 0.0
  %728 = vmatpush.msra.mxu0 0.0
  %729 = vmatpush.msra.mxu0 0.0
  %730 = vmatpush.msra.mxu0 0.0
  %731 = vmatpush.msra.mxu0 0.0
  %732 = vmatpush.msra.mxu0 0.0
  %733 = vmatpush.msra.mxu0 0.0
  %734 = vmatpush.msra.mxu0 0.0
  %735 = vmatpush.msra.mxu0 0.0
  %736 = vmatpush.msra.mxu0 0.0
  %737 = vmatpush.msra.mxu0 0.0
  %738 = vmatpush.msra.mxu0 0.0
  %739 = vmatpush.msra.mxu0 0.0
  %740 = vmatpush.msra.mxu0 %v659
  %741 = vmatmul.f32.gmra.mxu0 %v663
  %v742 = vpop.f32.mrf.mxu0
  %v743 = vadd.f32 0.0, %v742
  %744 = vdwg.mxu0
  %v745 = vadd.f32 %v683, %v703
  %v746 = vadd.f32 %v745, %v723
  %v747 = vadd.f32 %v746, %v743
  %748 = vadd.xlane.f32.xlu0 %v747
  %v749 = vpop.xlane.xlu0 %748
  %v750 = vmul.f32 %v749, 0.001953125
  %v751 = vsub.f32 %v683, %v750
  %v752 = vsub.f32 %v703, %v750
  %v753 = vsub.f32 %v723, %v750
  %v754 = vsub.f32 %v743, %v750
  %v755 = vmul.f32 %v751, %v751
  %v756 = vmul.f32 %v752, %v752
  %v757 = vmul.f32 %v753, %v753
  %v758 = vmul.f32 %v754, %v754
  %v759 = vadd.f32 %v755, %v756
  %v760 = vadd.f32 %v759, %v757
  %v761 = vadd.f32 %v760, %v758
  %762 = vadd.xlane.f32.xlu0 %v761
  %v763 = vpop.xlane.xlu0 %762
  %v764 = vmul.f32 %v763, 0.001953125
  %v765 = vadd.f32 %v764, 1e-05
  %v766 = vrsqrt.pop %v765
  %v767 = vmul.f32 %v766, %v765
  %v768 = vmul.f32 %v767, %v766
  %v769 = vmul.f32 0.5, %v768
  %v770 = vsub.f32 1.5, %v769
  %v771 = vmul.f32 %v766, %v770
  %vm772 = vweird.f32 %v765
  %vm773 = vweird.f32 %v766
  %vm774 = vmor %vm772, %vm773
  %v775 = vsel %vm774, %v766, %v771
  %v776 = vmul.f32 %v220, %v775
  %778 = vset.pattern.permute.xlu0 6
  %779 = vperm.xlu0 %778, %v776
  %v780 = vpop.permute.xlu0 %779
  %v782 = vmul.f32 %v751, %v780
  %v783 = vmul.f32 %v752, %v780
  %v784 = vmul.f32 %v753, %v780
  %v785 = vmul.f32 %v754, %v780
  %786 = vset.pattern.permute.xlu0 7
  %787 = vperm.xlu0 %786, %v220
  %v788 = vpop.permute.xlu0 %787
  %v790 = vadd.f32 %v782, %v788
  %v791 = vadd.f32 %v783, %v788
  %v792 = vadd.f32 %v784, %v788
  %v793 = vadd.f32 %v785, %v788
  %v794 = vmax.f32 %v790, 0.0
  %v795 = vmax.f32 %v791, 0.0
  %v796 = vmax.f32 %v792, 0.0
  %v797 = vmax.f32 %v793, 0.0
  %798 = vst [vmem:[%s4] sm:$0xff] %v794
  %799 = vst [vmem:[%s4 + $0x8] sm:$0xff] %v795
  %800 = vst [vmem:[%s4 + $0x10] sm:$0xff] %v796
  %801 = vst [vmem:[%s4 + $0x18] sm:$0xff] %v797
  // Predicated region
  $region18: #{basic_frame_block_forward.1} parent=0 // pred_check
    _
  $region19: #{basic_frame_block_forward.1} parent=0 // pred_check_branch
    %803 = sbr.rel (0) target = $region21
  $region20: #{basic_frame_block_forward.1} parent=0 // pred_region
    _
  $region21: #{basic_frame_block_forward.1} parent=0 // pred_fallthru
    _
  // Predicated region
  $region22: #{basic_frame_block_forward.1} parent=0 // pred_check
    _
  $region23: #{basic_frame_block_forward.1} parent=0 // pred_check_branch
    %805 = sbr.rel (0) target = $region25
  $region24: #{basic_frame_block_forward.1} parent=0 // pred_region
    _
  $region25: #{basic_frame_block_forward.1} parent=0 // pred_fallthru
    _

</llo_original>
